<compile_context>
chip_gen: v7x
topology: tpu7x:2x2x1
jax: 0.10.0
libtpu: 0.0.40
codegen_flags: <defaults>
</compile_context>

<pallas_src>
import functools

import jax
import jax.numpy as jnp
from jax.experimental import pallas as pl
from jax.experimental.pallas import tpu as pltpu


# ----------------------------------------------------------------------------- helpers


def _vmem_capacity_bytes() -> int:
    """Physical VMEM per TensorCore; conservative 64 MiB (v7x) if the query fails."""
    try:
        info = pltpu.get_tpu_info()
        cap = getattr(info, "vmem_capacity_bytes", None)
        if cap:
            return int(cap)
    except Exception:
        pass
    return 64 * 1024 * 1024


def _pick_c_tile(C: int, HW: int, itemsize: int, budget: int):
    """Channel tile for the fused path: 4 buffers (in+out, double-buffered) must fit."""
    per_channel = HW * itemsize
    max_c = budget // (4 * per_channel)
    if max_c >= C:
        return C
    if max_c < 8:
        return None  # even an 8-channel slab does not fit -> two-pass fallback
    tc = int(max_c // 8) * 8
    # Prefer a tile that divides C (avoids a partial last block); correctness does not
    # depend on it (per-channel rows are independent, partial stores are masked).
    for cand in range(tc, 7, -8):
        if C % cand == 0:
            return cand
    return tc


def _pick_hw_tile(HW: int, C: int, itemsize: int, budget: int) -> int:
    """Byte-targeted, lane-aligned (multiple of 128) HW tile for the two-pass path."""
    target_bytes = min(2 << 20, max(budget // 6, 128 * C * itemsize))
    tile = (target_bytes // (C * itemsize)) // 128 * 128
    tile = max(int(tile), 128)
    if HW <= tile:
        return HW  # single full-extent block (always legal, no padding)
    return tile  # multiple of 128; ragged last tile handled by the in-kernel mask


# ----------------------------------------------------------------------------- kernels


def _eca_fused_kernel(x_ref, wc_ref, o_ref, *, hw_total):
    """Single-pass ECA: mean over HW lanes, gate, scale — all on one resident slab.

    x_ref:  (1, tc_c, HW)   activation slab (full HW extent -> no padding in-block)
    wc_ref: (1, tc_c, 1)    center tap of the depthwise Conv1d weight (f32)
    o_ref:  (1, tc_c, HW)   output slab
    """
    x = x_ref[...].astype(jnp.float32)
    avg = jnp.sum(x, axis=-1, keepdims=True) * (1.0 / hw_total)      # (1, tc_c, 1)
    gate = jax.nn.sigmoid(avg * wc_ref[...])                          # (1, tc_c, 1)
    o_ref[...] = (x * gate).astype(o_ref.dtype)


def _eca_pool_kernel(x_ref, wc_ref, gate_ref, sum_ref, *, hw_total):
    """Fallback pool: running f32 sum over the HW grid axis + one-shot gate finalize.

    x_ref:    (1, C, HW_TILE)    activation tile
    wc_ref:   (1, C, 1)          depthwise-conv center tap (resident, f32)
    gate_ref: (1, C, 1) f32      sigmoid(mean * w_center), written on the last HW step
    sum_ref:  (1, C, 1) f32 VMEM running-sum accumulator (C stays on sublanes)
    """
    h = pl.program_id(1)

    @pl.when(h == 0)
    def _():
        sum_ref[...] = jnp.zeros_like(sum_ref)

    hw_tile = x_ref.shape[-1]
    x = x_ref[...].astype(jnp.float32)
    if hw_total % hw_tile != 0:
        # ragged last tile: zero out-of-range lanes before reducing
        col = h * hw_tile + jax.lax.broadcasted_iota(jnp.int32, x.shape, dimension=2)
        x = jnp.where(col < hw_total, x, 0.0)
    sum_ref[...] += jnp.sum(x, axis=-1, keepdims=True)

    @pl.when(h == pl.num_programs(1) - 1)
    def _():
        avg = sum_ref[...] * (1.0 / hw_total)                         # (1, C, 1)
        gate_ref[...] = jax.nn.sigmoid(avg * wc_ref[...])


def _eca_scale_kernel(x_ref, gate_ref, o_ref):
    """Fallback scale: o = x * gate (f32 multiply, cast at the store)."""
    o_ref[...] = (x_ref[...].astype(jnp.float32) * gate_ref[...]).astype(o_ref.dtype)


# ----------------------------------------------------------------------------- wrapper


def eca_block(x, conv_w, *, force_two_pass: bool = False, hw_tile: int | None = None):
    """ECA forward. x: (B, C, H, W); conv_w: (C, 1, K) depthwise Conv1d weight."""
    B, C, H, W = x.shape
    K = conv_w.shape[-1]
    assert K % 2 == 1, "ECA conv kernel size must be odd"
    HW = H * W
    itemsize = x.dtype.itemsize

    x_flat = x.reshape(B, C, HW)
    # Only the center tap touches a non-padding input (pooled sequence length is 1).
    w_center = conv_w[:, 0, K // 2].reshape(1, C, 1).astype(jnp.float32)

    cap = _vmem_capacity_bytes()
    budget = min(int(cap * 0.7), 100 * 1024 * 1024)   # headroom; 44 MiB v7x, ~90 MiB v6e

    tc_c = None if force_two_pass else _pick_c_tile(C, HW, itemsize, budget)

    if tc_c is not None:
        # ---------------- fused single-pass path (read x once, write once) ----------
        n_c = pl.cdiv(C, tc_c)
        out = pl.pallas_call(
            functools.partial(_eca_fused_kernel, hw_total=HW),
            out_shape=jax.ShapeDtypeStruct((B, C, HW), x.dtype),
            grid_spec=pltpu.PrefetchScalarGridSpec(
                num_scalar_prefetch=0,
                grid=(B, n_c),
                in_specs=[
                    pl.BlockSpec((1, tc_c, HW), lambda b, c: (b, c, 0)),
                    pl.BlockSpec((1, tc_c, 1), lambda b, c: (0, c, 0)),
                ],
                out_specs=pl.BlockSpec((1, tc_c, HW), lambda b, c: (b, c, 0)),
            ),
            compiler_params=pltpu.CompilerParams(
                dimension_semantics=("parallel", "parallel"),
                vmem_limit_bytes=budget,
            ),
            cost_estimate=pl.CostEstimate(
                flops=2 * B * C * HW + 2 * B * C,
                transcendentals=B * C,
                bytes_accessed=2 * B * C * HW * itemsize + C * 4,
            ),
        )(x_flat, w_center)
        return out.reshape(B, C, H, W)

    # -------------------- two-pass fallback (slab does not fit VMEM) ----------------
    if hw_tile is None:
        hw_tile = _pick_hw_tile(HW, C, itemsize, budget)
    n_hw = pl.cdiv(HW, hw_tile)

    gate = pl.pallas_call(
        functools.partial(_eca_pool_kernel, hw_total=HW),
        out_shape=jax.ShapeDtypeStruct((B, C, 1), jnp.float32),
        grid_spec=pltpu.PrefetchScalarGridSpec(
            num_scalar_prefetch=0,
            grid=(B, n_hw),
            in_specs=[
                pl.BlockSpec((1, C, hw_tile), lambda b, h: (b, 0, h)),
                pl.BlockSpec((1, C, 1), lambda b, h: (0, 0, 0)),   # weight stays resident
            ],
            out_specs=pl.BlockSpec((1, C, 1), lambda b, h: (b, 0, 0)),
            scratch_shapes=[pltpu.VMEM((1, C, 1), jnp.float32)],
        ),
        compiler_params=pltpu.CompilerParams(
            dimension_semantics=("parallel", "arbitrary"),
            vmem_limit_bytes=budget,
        ),
        cost_estimate=pl.CostEstimate(
            flops=B * C * HW + 2 * B * C,
            transcendentals=B * C,
            bytes_accessed=B * C * HW * itemsize + C * 4 + B * C * 4,
        ),
    )(x_flat, w_center)

    out = pl.pallas_call(
        _eca_scale_kernel,
        out_shape=jax.ShapeDtypeStruct((B, C, HW), x.dtype),
        grid_spec=pltpu.PrefetchScalarGridSpec(
            num_scalar_prefetch=0,
            grid=(B, n_hw),
            in_specs=[
                pl.BlockSpec((1, C, hw_tile), lambda b, h: (b, 0, h)),
                pl.BlockSpec((1, C, 1), lambda b, h: (b, 0, 0)),
            ],
            out_specs=pl.BlockSpec((1, C, hw_tile), lambda b, h: (b, 0, h)),
        ),
        compiler_params=pltpu.CompilerParams(
            dimension_semantics=("parallel", "parallel"),
            vmem_limit_bytes=budget,
        ),
        cost_estimate=pl.CostEstimate(
            flops=B * C * HW,
            transcendentals=0,
            bytes_accessed=2 * B * C * HW * itemsize + B * C * 4,
        ),
    )(x_flat, gate)

    return out.reshape(B, C, H, W)


# ----------------------------------------------------------------------------- reference


def eca_block_ref(x, conv_w):
    """Pure-JAX reference matching the PyTorch forward (true depthwise Conv1d)."""
    B, C, H, W = x.shape
    K = conv_w.shape[-1]
    avg = jnp.mean(x.astype(jnp.float32), axis=(2, 3)).reshape(B, C, 1)
    eca = jax.lax.conv_general_dilated(
        avg, conv_w.astype(jnp.float32),
        window_strides=(1,), padding=[(K // 2, K // 2)],
        dimension_numbers=("NCH", "OIH", "NCH"),
        feature_group_count=C)
    weight = jax.nn.sigmoid(eca).reshape(B, C, 1, 1)
    return (x.astype(jnp.float32) * weight).astype(x.dtype)


if __name__ == "__main__":
    key = jax.random.PRNGKey(0)
    kx, kw, kx2 = jax.random.split(key, 3)

    B, C, H, W = 2, 64, 16, 16
    K = 3  # module default kernel_size

    x = jax.random.normal(kx, (B, C, H, W), dtype=jnp.float32)
    # The PyTorch module instantiates the depthwise Conv1d (bias=False, random init)
    # inside forward(); here its weight (C, 1, K) is a deterministic explicit input.
    conv_w = jax.random.normal(kw, (C, 1, K), dtype=jnp.float32) * 0.5
    ref = eca_block_ref(x, conv_w)

    # 1) fused single-pass path (default)
    out = jax.block_until_ready(eca_block(x, conv_w))
    assert out.shape == (B, C, H, W)
    assert jnp.allclose(out, ref, atol=1e-5, rtol=1e-5), float(jnp.max(jnp.abs(out - ref)))

    # 2) two-pass fallback, multi-step HW streaming (exercises the running-sum path)
    out2 = jax.block_until_ready(eca_block(x, conv_w, force_two_pass=True, hw_tile=128))
    assert jnp.allclose(out2, ref, atol=1e-5, rtol=1e-5)

    # 3) ragged HW (15*15 = 225, not a multiple of 128): fused full-extent block and
    #    two-pass masked last tile.
    x2 = jax.random.normal(kx2, (B, C, 15, 15), dtype=jnp.float32)
    ref2 = eca_block_ref(x2, conv_w)
    out3 = jax.block_until_ready(eca_block(x2, conv_w))
    assert jnp.allclose(out3, ref2, atol=1e-5, rtol=1e-5)
    out4 = jax.block_until_ready(eca_block(x2, conv_w, force_two_pass=True, hw_tile=128))
    assert jnp.allclose(out4, ref2, atol=1e-5, rtol=1e-5)

    print("KERNEL_OK")
</pallas_src>

<mosaic_0001>
module attributes {stable_mosaic.version = 11 : i64} {
  func.func @_eca_fused_kernel(%arg0: i32, %arg1: i32, %arg2: memref<1x64x256xf32, #tpu.memory_space<vmem>>, %arg3: memref<1x64x1xf32, #tpu.memory_space<vmem>>, %arg4: memref<1x64x256xf32, #tpu.memory_space<vmem>>) attributes {dimension_semantics = [#tpu.dimension_semantics<parallel>, #tpu.dimension_semantics<parallel>], iteration_bounds = array<i64: 2, 1>, scalar_prefetch = 0 : i64, scratch_operands = 0 : i64, tpu.core_type = #tpu.core_type<tc>, window_params = [{transform_indices = @transform_0, window_bounds = array<i64: 1, 64, 256>}, {transform_indices = @transform_1, window_bounds = array<i64: 1, 64, 1>}, {transform_indices = @transform_2, window_bounds = array<i64: 1, 64, 256>}]} {
    %c0 = arith.constant 0 : index
    %c0_0 = arith.constant 0 : index
    %c0_1 = arith.constant 0 : index
    %0 = vector.load %arg2[%c0, %c0_0, %c0_1] : memref<1x64x256xf32, #tpu.memory_space<vmem>>, vector<1x64x256xf32>
    %cst = arith.constant dense<0.000000e+00> : vector<1x64xf32>
    %1 = vector.multi_reduction <add>, %0, %cst [2] : vector<1x64x256xf32> to vector<1x64xf32>
    %2 = vector.shape_cast %1 : vector<1x64xf32> to vector<1x64x1xf32>
    %cst_2 = arith.constant 3.906250e-03 : f32
    %3 = vector.broadcast %cst_2 : f32 to vector<1x64x1xf32>
    %4 = arith.mulf %2, %3 : vector<1x64x1xf32>
    %c0_3 = arith.constant 0 : index
    %c0_4 = arith.constant 0 : index
    %c0_5 = arith.constant 0 : index
    %5 = vector.load %arg3[%c0_3, %c0_4, %c0_5] : memref<1x64x1xf32, #tpu.memory_space<vmem>>, vector<1x64x1xf32>
    %6 = arith.mulf %4, %5 : vector<1x64x1xf32>
    %7 = arith.negf %6 : vector<1x64x1xf32>
    %8 = math.exp %7 : vector<1x64x1xf32>
    %cst_6 = arith.constant 1.000000e+00 : f32
    %9 = vector.broadcast %cst_6 : f32 to vector<1x64x1xf32>
    %10 = arith.addf %9, %8 : vector<1x64x1xf32>
    %11 = arith.divf %9, %10 : vector<1x64x1xf32>
    %12 = vector.broadcast %11 : vector<1x64x1xf32> to vector<1x64x256xf32>
    %13 = arith.mulf %0, %12 : vector<1x64x256xf32>
    %c0_7 = arith.constant 0 : index
    %c0_8 = arith.constant 0 : index
    %c0_9 = arith.constant 0 : index
    %14 = vector.load %arg4[%c0_7, %c0_8, %c0_9] : memref<1x64x256xf32, #tpu.memory_space<vmem>>, vector<1x64x256xf32>
    tpu.vector_store %arg4[%c0_7, %c0_8, %c0_9], %13 {strides = array<i32>} : memref<1x64x256xf32, #tpu.memory_space<vmem>>, vector<1x64x256xf32>,
    return
  }
  func.func @transform_0(%arg0: i32, %arg1: i32) -> (i32, i32, i32) {
    %c0_i32 = arith.constant 0 : i32
    %c0_i32_0 = arith.constant 0 : i32
    return %arg0, %arg1, %c0_i32 : i32, i32, i32
  }
  func.func @transform_1(%arg0: i32, %arg1: i32) -> (i32, i32, i32) {
    %c0_i32 = arith.constant 0 : i32
    %c0_i32_0 = arith.constant 0 : i32
    %c0_i32_1 = arith.constant 0 : i32
    return %c0_i32, %arg1, %c0_i32_0 : i32, i32, i32
  }
  func.func @transform_2(%arg0: i32, %arg1: i32) -> (i32, i32, i32) {
    %c0_i32 = arith.constant 0 : i32
    %c0_i32_0 = arith.constant 0 : i32
    return %arg0, %arg1, %c0_i32 : i32, i32, i32
  }
}

</mosaic_0001>

<llo_original>
// kernel: tpu_custom_call.1
$region0: #{tpu_custom_call.1}
  #allocation0 [shape = 'u32[]', space=smem, size = 0x4, offset = 0x4, fixed_abs, tag = 'smem constant byte address 0x4 - core index']
  #allocation1 [shape = 'u32[144,128]{1,0:T(1,128)}', space=vmem, size = 0x12000, scoped, tag = 'internal scratch']
  %s0 = inlined_call_operand.hbm [shape: f32[2,64,256], index: 0, kind: input, shape index: {}]
  %s1 = inlined_call_operand.vmem [shape: f32[1,64,1], index: 1, kind: input, shape index: {}]
  %s2 = inlined_call_operand.hbm [shape: f32[2,64,256], index: 2, kind: output, shape index: {}]
  %s3 = sld [smem:[#allocation0]]
  $region45: #{tpu_custom_call.1} parent=0
    _
  %s5 = ssub.s32 1, %s3
  %s6 = scalar_select 0, %s5, %s3
  $region1: #{tpu_custom_call.1} parent=0
    #allocation2 [shape = 'u8[131072]{0}', space=vmem, size = 0x20000, scoped, tag = 'input window, operand 0']
    #allocation3 [shape = 's32[2]{0}', space=sflag, size = 0x8, scoped, tag = 'scoped memory for tpu_custom_call.1']
    #allocation4 [shape = 's32[2]{0}', space=sflag, size = 0x8, scoped, tag = 'scoped memory for tpu_custom_call.1']
    #allocation5 [shape = 'u8[131072]{0}', space=vmem, size = 0x20000, scoped, tag = 'output window, operand 0']
    %7 = vsyncpa [#allocation3], 0
    %s8 = scalar_lea.sflag [#allocation3], 1
    %9 = vsyncpa %s8, 0
    %10 = vsyncpa [#allocation4], 0
    %s11 = scalar_lea.sflag [#allocation4], 1
    %12 = vsyncpa %s11, 0
    loop: start=0, step=1, limit=4
    $region2: #{tpu_custom_call.1} parent=1 // loop_pre_header
      _
    $region3: #{tpu_custom_call.1} parent=1 // loop_header
      %s14 = sphi 0, %s18
      %p15 = scmp.ge.s32.totalorder %s14, 4
      %s21 = sphi 0, %s33
      %s22 = sphi 0, %s29
      %s23 = sphi 0, %s21
      %s24 = sphi 0, %s22
      %s25 = sphi 0, %s23
      %s26 = sphi 0, %s24
      %s38 = sphi 0, %s40
      %s41 = sphi 0, %s38
      %s42 = sphi 0, %s41
      %s58 = sphi 0, %s42
      %s64 = sphi 0, %s66
      %s67 = sphi 0, %s64
      %s68 = sphi 0, %s67
      %s84 = sphi 0, %s68
      %s92 = sphi 0, %s94
      %s95 = sphi 0, %s92
      %s96 = sphi 0, %s95
      %s112 = sphi 0, %s96
    $region4: #{tpu_custom_call.1} parent=1 // loop_header_branch
      %17 = sbr.rel (%p15) target = $region8
    $region5: #{tpu_custom_call.1} parent=1 // loop_body
      %s19 = ssub.s32 %s14, 1
      %s20 = ssub.s32 %s14, 2
      %s27 = sadd.s32 1, %s22
      %p28 = scmp.ge.s32.totalorder %s27, 1
      %s29 = scalar_select %p28, 0, %s27
      %s30 = sadd.s32 1, %s21
      %s31 = scalar_select %p28, %s30, %s21
      %p32 = scmp.ge.s32.totalorder %s31, 2
      %s33 = scalar_select %p32, 0, %s31
      %s34 = ssub.s32 %s21, %s33
      %s35 = ssub.s32 %s22, %s29
      %s36 = sor.u32 %s34, %s35
      %p37 = scmp.eq.s32.totalorder %s36, 0
      %s39 = sadd.s32 %s38, 1
      %s40 = scalar_select %p37, %s38, %s39
      %p43 = pneg %p37
      %p44 = scmp.eq.s32.totalorder %s14, 1
      %p45 = por %p43, %p44
      %p46 = scmp.ne.s32.totalorder %s38, %s41
      %p47 = scmp.eq.s32.totalorder %s14, 0
      %p48 = por %p46, %p47
      %p49 = scmp.ne.s32.totalorder %s38, %s41
      %p50 = scmp.eq.s32.totalorder %s19, 1
      %p51 = por %p49, %p50
      %p52 = scmp.ne.s32.totalorder %s41, %s42
      %p53 = scmp.eq.s32.totalorder %s19, 0
      %p54 = por %p52, %p53
      %p55 = scmp.ne.s32.totalorder %s41, %s42
      %p56 = scmp.eq.s32.totalorder %s20, 1
      %p57 = por %p55, %p56
      %p59 = scmp.ne.s32.totalorder %s42, %s58
      %p60 = scmp.eq.s32.totalorder %s20, 0
      %p61 = por %p59, %p60
      %s62 = ssub.s32 %s22, %s29
      %p63 = scmp.eq.s32.totalorder %s62, 0
      %s65 = sadd.s32 %s64, 1
      %s66 = scalar_select %p63, %s64, %s65
      %p69 = pneg %p63
      %p70 = scmp.eq.s32.totalorder %s14, 1
      %p71 = por %p69, %p70
      %p72 = scmp.ne.s32.totalorder %s64, %s67
      %p73 = scmp.eq.s32.totalorder %s14, 0
      %p74 = por %p72, %p73
      %p75 = scmp.ne.s32.totalorder %s64, %s67
      %p76 = scmp.eq.s32.totalorder %s19, 1
      %p77 = por %p75, %p76
      %p78 = scmp.ne.s32.totalorder %s67, %s68
      %p79 = scmp.eq.s32.totalorder %s19, 0
      %p80 = por %p78, %p79
      %p81 = scmp.ne.s32.totalorder %s67, %s68
      %p82 = scmp.eq.s32.totalorder %s20, 1
      %p83 = por %p81, %p82
      %p85 = scmp.ne.s32.totalorder %s68, %s84
      %p86 = scmp.eq.s32.totalorder %s20, 0
      %p87 = por %p85, %p86
      %s88 = ssub.s32 %s21, %s33
      %s89 = ssub.s32 %s22, %s29
      %s90 = sor.u32 %s88, %s89
      %p91 = scmp.eq.s32.totalorder %s90, 0
      %s93 = sadd.s32 %s92, 1
      %s94 = scalar_select %p91, %s92, %s93
      %p97 = pneg %p91
      %p98 = scmp.eq.s32.totalorder %s14, 1
      %p99 = por %p97, %p98
      %p100 = scmp.ne.s32.totalorder %s92, %s95
      %p101 = scmp.eq.s32.totalorder %s14, 0
      %p102 = por %p100, %p101
      %p103 = scmp.ne.s32.totalorder %s92, %s95
      %p104 = scmp.eq.s32.totalorder %s19, 1
      %p105 = por %p103, %p104
      %p106 = scmp.ne.s32.totalorder %s95, %s96
      %p107 = scmp.eq.s32.totalorder %s19, 0
      %p108 = por %p106, %p107
      %p109 = scmp.ne.s32.totalorder %s95, %s96
      %p110 = scmp.eq.s32.totalorder %s20, 1
      %p111 = por %p109, %p110
      %p113 = scmp.ne.s32.totalorder %s96, %s112
      %p114 = scmp.eq.s32.totalorder %s20, 0
      %p115 = por %p113, %p114
      %p116 = scmp.le.s32.totalorder 1, %s14
      %p117 = scmp.lt.s32.totalorder %s14, 3
      %p118 = pnand %p116, %p117
      %p119 = pneg %p118
      // Predicated region
      $region9: #{tpu_custom_call.1} parent=5 // pred_check
        _
      $region10: #{tpu_custom_call.1} parent=5 // pred_check_branch
        %121 = sbr.rel (%p118) target = $region12
      $region11: #{tpu_custom_call.1} parent=5 // pred_region
        %s122 = ssub.s32 %s14, 1
        // Predicated region
        $region13: #{tpu_custom_call.1} parent=11 // pred_check
          %p123 = pneg %p80
        $region14: #{tpu_custom_call.1} parent=11 // pred_check_branch
          %125 = sbr.rel (%p123) target = $region16
        $region15: #{tpu_custom_call.1} parent=11 // pred_region
          %s126 = smul.u32 8, %s24
          %p127 = scmp.lt.s32.totalorder %s126, 7
          %s128 = scalar_select %p127, %s126, 7
          %s129 = smul.addr %s128, 8
          %s130 = scalar_lea.vmem %s1, %s129
          %s131 = smul.u32 8, %s24
        $region16: #{tpu_custom_call.1} parent=11 // pred_fallthru
          _
      $region12: #{tpu_custom_call.1} parent=5 // pred_fallthru
        _
      %p132 = scmp.lt.s32.totalorder %s14, 2
      // Predicated region
      $region17: #{tpu_custom_call.1} parent=5 // pred_check
        %p133 = pneg %p132
      $region18: #{tpu_custom_call.1} parent=5 // pred_check_branch
        %135 = sbr.rel (%p133) target = $region20
      $region19: #{tpu_custom_call.1} parent=5 // pred_region
        // Predicated region
        $region21: #{tpu_custom_call.1} parent=19 // pred_check
          %p136 = pneg %p48
        $region22: #{tpu_custom_call.1} parent=19 // pred_check_branch
          %138 = sbr.rel (%p136) target = $region24
        $region23: #{tpu_custom_call.1} parent=19 // pred_region
          %s139 = sand.u32 %s38, 1
          %s140 = scalar_lea.sflag [#allocation3], %s139
          %s141 = sand.u32 %s38, 1
          %s142 = smul.addr %s141, 128
          %s143 = scalar_lea.vmem [#allocation2], %s142
          %s144 = smul.u32 8, %s22
          %s146 = ssub.s32 2048, 2048
          %147 = vsyncadd %s140, %s146
          %s148 = smul.addr %s144, 2
          %s149 = smul.addr %s21, 16
          %s150 = sadd.s32 %s148, %s149
          %s151 = smul.addr %s150, 128
          %s152 = scalar_lea.hbm %s0, %s151
          %s153 = sshll.u32 %s143, 4
          %s154 = int_to_ptr.vmem [resolvable:$true] %s153
          %159 = dma.hbm_to_vmem [thread:$0]  %s152, 2048, %s154, %s140, 256, 256, 16
        $region24: #{tpu_custom_call.1} parent=19 // pred_fallthru
          _
      $region20: #{tpu_custom_call.1} parent=5 // pred_fallthru
        _
      %p160 = scmp.le.s32.totalorder 1, %s14
      %p161 = scmp.lt.s32.totalorder %s14, 3
      %p162 = pnand %p160, %p161
      %p163 = pneg %p162
      // Predicated region
      $region25: #{tpu_custom_call.1} parent=5 // pred_check
        _
      $region26: #{tpu_custom_call.1} parent=5 // pred_check_branch
        %165 = sbr.rel (%p162) target = $region28
      $region27: #{tpu_custom_call.1} parent=5 // pred_region
        %s166 = ssub.s32 %s14, 1
        %s167 = sand.u32 %s41, 1
        %s168 = scalar_lea.sflag [#allocation3], %s167
        %s169 = sand.u32 %s41, 1
        %s170 = smul.addr %s169, 128
        %s171 = scalar_lea.vmem [#allocation2], %s170
        // Predicated region
        $region29: #{tpu_custom_call.1} parent=27 // pred_check
          %p172 = pneg %p54
        $region30: #{tpu_custom_call.1} parent=27 // pred_check_branch
          %174 = sbr.rel (%p172) target = $region32
        $region31: #{tpu_custom_call.1} parent=27 // pred_region
          %175 = dma.done %s168, 2048
        $region32: #{tpu_custom_call.1} parent=27 // pred_fallthru
          _
        %s176 = sand.u32 %s41, 1
        %s177 = scalar_lea.sflag [#allocation3], %s176
        %s178 = sand.u32 %s41, 1
        %s179 = smul.addr %s178, 128
        %s180 = scalar_lea.vmem [#allocation2], %s179
        %p181 = pneg %p54
        %p182 = pneg %p51
        %s183 = smul.u32 8, %s24
        %p184 = scmp.lt.s32.totalorder %s183, 7
        %s185 = scalar_select %p184, %s183, 7
        %s186 = smul.addr %s185, 8
        %s187 = scalar_lea.vmem %s1, %s186
        %p188 = pneg %p80
        %p189 = pneg %p77
        %p190 = pneg %p108
        %p191 = pneg %p105
        %s192 = sand.u32 %s95, 1
        %s193 = scalar_lea.sflag [#allocation4], %s192
        %s194 = sand.u32 %s95, 1
        %s195 = smul.addr %s194, 128
        %s196 = scalar_lea.vmem [#allocation5], %s195
        %s197 = smul.u32 8, %s24
        %s198 = smul.u32 8, %s24
        %p199 = scmp.lt.s32.totalorder %s198, 7
        %s200 = scalar_select %p199, %s198, 7
        %s201 = smul.addr %s200, 8
        %s202 = scalar_lea.vmem %s1, %s201
        %s203 = smul.u32 8, %s24
        %s204 = smul.u32 8, %s24
        %v205 = vld [vmem:[%s171] sm:$0xff]
        %v206 = vld [vmem:[%s171 + $0x8] sm:$0xff]
        %v207 = vld [vmem:[%s171 + $0x10] sm:$0xff]
        %v208 = vld [vmem:[%s171 + $0x18] sm:$0xff]
        %v209 = vld [vmem:[%s171 + $0x20] sm:$0xff]
        %v210 = vld [vmem:[%s171 + $0x28] sm:$0xff]
        %v211 = vld [vmem:[%s171 + $0x30] sm:$0xff]
        %v212 = vld [vmem:[%s171 + $0x38] sm:$0xff]
        %v213 = vld [vmem:[%s171 + $0x40] sm:$0xff]
        %v214 = vld [vmem:[%s171 + $0x48] sm:$0xff]
        %v215 = vld [vmem:[%s171 + $0x50] sm:$0xff]
        %v216 = vld [vmem:[%s171 + $0x58] sm:$0xff]
        %v217 = vld [vmem:[%s171 + $0x60] sm:$0xff]
        %v218 = vld [vmem:[%s171 + $0x68] sm:$0xff]
        %v219 = vld [vmem:[%s171 + $0x70] sm:$0xff]
        %v220 = vld [vmem:[%s171 + $0x78] sm:$0xff]
        %v221 = vadd.f32 %v205, %v206
        %222 = vadd.xlane.f32.xlu0 %v221
        %v223 = vpop.xlane.xlu0 %222
        %v224 = vadd.f32 %v207, %v208
        %225 = vadd.xlane.f32.xlu0 %v224
        %v226 = vpop.xlane.xlu0 %225
        %v227 = vadd.f32 %v209, %v210
        %228 = vadd.xlane.f32.xlu0 %v227
        %v229 = vpop.xlane.xlu0 %228
        %v230 = vadd.f32 %v211, %v212
        %231 = vadd.xlane.f32.xlu0 %v230
        %v232 = vpop.xlane.xlu0 %231
        %v233 = vadd.f32 %v213, %v214
        %234 = vadd.xlane.f32.xlu0 %v233
        %v235 = vpop.xlane.xlu0 %234
        %v236 = vadd.f32 %v215, %v216
        %237 = vadd.xlane.f32.xlu0 %v236
        %v238 = vpop.xlane.xlu0 %237
        %v239 = vadd.f32 %v217, %v218
        %240 = vadd.xlane.f32.xlu0 %v239
        %v241 = vpop.xlane.xlu0 %240
        %v242 = vadd.f32 %v219, %v220
        %243 = vadd.xlane.f32.xlu0 %v242
        %v244 = vpop.xlane.xlu0 %243
        %v245 = vmul.f32 %v223, 0.00390625
        %v246 = vmul.f32 %v226, 0.00390625
        %v247 = vmul.f32 %v229, 0.00390625
        %v248 = vmul.f32 %v232, 0.00390625
        %v249 = vmul.f32 %v235, 0.00390625
        %v250 = vmul.f32 %v238, 0.00390625
        %v251 = vmul.f32 %v241, 0.00390625
        %v252 = vmul.f32 %v244, 0.00390625
        %v253 = vld [vmem:[%s202] sm:$0xff]
        %v254 = vld [vmem:[%s202 + $0x8] sm:$0xff]
        %v255 = vld [vmem:[%s202 + $0x10] sm:$0xff]
        %v256 = vld [vmem:[%s202 + $0x18] sm:$0xff]
        %v257 = vld [vmem:[%s202 + $0x20] sm:$0xff]
        %v258 = vld [vmem:[%s202 + $0x28] sm:$0xff]
        %v259 = vld [vmem:[%s202 + $0x30] sm:$0xff]
        %v260 = vld [vmem:[%s202 + $0x38] sm:$0xff]
        %v261 = vmul.f32 %v245, %v253
        %v262 = vmul.f32 %v246, %v254
        %v263 = vmul.f32 %v247, %v255
        %v264 = vmul.f32 %v248, %v256
        %v265 = vmul.f32 %v249, %v257
        %v266 = vmul.f32 %v250, %v258
        %v267 = vmul.f32 %v251, %v259
        %v268 = vmul.f32 %v252, %v260
        %v269 = vxor.u32 %v261, 2147483648
        %v270 = vxor.u32 %v262, 2147483648
        %v271 = vxor.u32 %v263, 2147483648
        %v272 = vxor.u32 %v264, 2147483648
        %v273 = vxor.u32 %v265, 2147483648
        %v274 = vxor.u32 %v266, 2147483648
        %v275 = vxor.u32 %v267, 2147483648
        %v276 = vxor.u32 %v268, 2147483648
        %v277 = vmul.f32 %v269, 1.442695
        %v278 = vpow.pop %v277
        %v279 = vmul.f32 %v270, 1.442695
        %v280 = vpow.pop %v279
        %v281 = vmul.f32 %v271, 1.442695
        %v282 = vpow.pop %v281
        %v283 = vmul.f32 %v272, 1.442695
        %v284 = vpow.pop %v283
        %v285 = vmul.f32 %v273, 1.442695
        %v286 = vpow.pop %v285
        %v287 = vmul.f32 %v274, 1.442695
        %v288 = vpow.pop %v287
        %v289 = vmul.f32 %v275, 1.442695
        %v290 = vpow.pop %v289
        %v291 = vmul.f32 %v276, 1.442695
        %v292 = vpow.pop %v291
        %v293 = vadd.f32 %v278, 1.0
        %v294 = vadd.f32 %v280, 1.0
        %v295 = vadd.f32 %v282, 1.0
        %v296 = vadd.f32 %v284, 1.0
        %v297 = vadd.f32 %v286, 1.0
        %v298 = vadd.f32 %v288, 1.0
        %v299 = vadd.f32 %v290, 1.0
        %v300 = vadd.f32 %v292, 1.0
        %v301 = vrcp.pop %v293
        %v302 = vmul.f32 1.0, %v301
        %v303 = vrcp.pop %v294
        %v304 = vmul.f32 1.0, %v303
        %v305 = vrcp.pop %v295
        %v306 = vmul.f32 1.0, %v305
        %v307 = vrcp.pop %v296
        %v308 = vmul.f32 1.0, %v307
        %v309 = vrcp.pop %v297
        %v310 = vmul.f32 1.0, %v309
        %v311 = vrcp.pop %v298
        %v312 = vmul.f32 1.0, %v311
        %v313 = vrcp.pop %v299
        %v314 = vmul.f32 1.0, %v313
        %v315 = vrcp.pop %v300
        %v316 = vmul.f32 1.0, %v315
        %318 = vset.pattern.permute.xlu0 0
        %319 = vperm.xlu0 %318, %v302
        %v320 = vpop.permute.xlu0 %319
        %323 = vset.pattern.permute.xlu0 0
        %324 = vperm.xlu0 %323, %v304
        %v325 = vpop.permute.xlu0 %324
        %328 = vset.pattern.permute.xlu0 0
        %329 = vperm.xlu0 %328, %v306
        %v330 = vpop.permute.xlu0 %329
        %333 = vset.pattern.permute.xlu0 0
        %334 = vperm.xlu0 %333, %v308
        %v335 = vpop.permute.xlu0 %334
        %338 = vset.pattern.permute.xlu0 0
        %339 = vperm.xlu0 %338, %v310
        %v340 = vpop.permute.xlu0 %339
        %343 = vset.pattern.permute.xlu0 0
        %344 = vperm.xlu0 %343, %v312
        %v345 = vpop.permute.xlu0 %344
        %348 = vset.pattern.permute.xlu0 0
        %349 = vperm.xlu0 %348, %v314
        %v350 = vpop.permute.xlu0 %349
        %353 = vset.pattern.permute.xlu0 0
        %354 = vperm.xlu0 %353, %v316
        %v355 = vpop.permute.xlu0 %354
        %v357 = vmul.f32 %v205, %v320
        %v358 = vmul.f32 %v206, %v320
        %v359 = vmul.f32 %v207, %v325
        %v360 = vmul.f32 %v208, %v325
        %v361 = vmul.f32 %v209, %v330
        %v362 = vmul.f32 %v210, %v330
        %v363 = vmul.f32 %v211, %v335
        %v364 = vmul.f32 %v212, %v335
        %v365 = vmul.f32 %v213, %v340
        %v366 = vmul.f32 %v214, %v340
        %v367 = vmul.f32 %v215, %v345
        %v368 = vmul.f32 %v216, %v345
        %v369 = vmul.f32 %v217, %v350
        %v370 = vmul.f32 %v218, %v350
        %v371 = vmul.f32 %v219, %v355
        %v372 = vmul.f32 %v220, %v355
        %373 = vst [vmem:[%s196] sm:$0xff] %v357
        %374 = vst [vmem:[%s196 + $0x8] sm:$0xff] %v358
        %375 = vst [vmem:[%s196 + $0x10] sm:$0xff] %v359
        %376 = vst [vmem:[%s196 + $0x18] sm:$0xff] %v360
        %377 = vst [vmem:[%s196 + $0x20] sm:$0xff] %v361
        %378 = vst [vmem:[%s196 + $0x28] sm:$0xff] %v362
        %379 = vst [vmem:[%s196 + $0x30] sm:$0xff] %v363
        %380 = vst [vmem:[%s196 + $0x38] sm:$0xff] %v364
        %381 = vst [vmem:[%s196 + $0x40] sm:$0xff] %v365
        %382 = vst [vmem:[%s196 + $0x48] sm:$0xff] %v366
        %383 = vst [vmem:[%s196 + $0x50] sm:$0xff] %v367
        %384 = vst [vmem:[%s196 + $0x58] sm:$0xff] %v368
        %385 = vst [vmem:[%s196 + $0x60] sm:$0xff] %v369
        %386 = vst [vmem:[%s196 + $0x68] sm:$0xff] %v370
        %387 = vst [vmem:[%s196 + $0x70] sm:$0xff] %v371
        %388 = vst [vmem:[%s196 + $0x78] sm:$0xff] %v372
        %s389 = sand.u32 %s95, 1
        %s390 = scalar_lea.sflag [#allocation4], %s389
        %s391 = sand.u32 %s95, 1
        %s392 = smul.addr %s391, 128
        %s393 = scalar_lea.vmem [#allocation5], %s392
        // Predicated region
        $region33: #{tpu_custom_call.1} parent=27 // pred_check
          %p394 = pneg %p105
        $region34: #{tpu_custom_call.1} parent=27 // pred_check_branch
          %396 = sbr.rel (%p394) target = $region36
        $region35: #{tpu_custom_call.1} parent=27 // pred_region
          %s397 = smul.u32 8, %s24
          %s399 = ssub.s32 2048, 2048
          %400 = vsyncadd %s390, %s399
          %s401 = smul.addr %s397, 2
          %s402 = smul.addr %s23, 16
          %s403 = sadd.s32 %s401, %s402
          %s404 = smul.addr %s403, 128
          %s405 = scalar_lea.hbm %s2, %s404
          %s406 = sshll.u32 %s393, 4
          %s407 = int_to_ptr.vmem [resolvable:$true] %s406
          %412 = dma.vmem_to_hbm [thread:$0]  %s407, 2048, %s405, %s390, 256, 256, 16
        $region36: #{tpu_custom_call.1} parent=27 // pred_fallthru
          _
      $region28: #{tpu_custom_call.1} parent=5 // pred_fallthru
        _
      %p413 = scmp.le.s32.totalorder 2, %s14
      // Predicated region
      $region37: #{tpu_custom_call.1} parent=5 // pred_check
        %p414 = pneg %p413
      $region38: #{tpu_custom_call.1} parent=5 // pred_check_branch
        %416 = sbr.rel (%p414) target = $region40
      $region39: #{tpu_custom_call.1} parent=5 // pred_region
        %s417 = ssub.s32 %s14, 2
        // Predicated region
        $region41: #{tpu_custom_call.1} parent=39 // pred_check
          %p418 = pneg %p111
        $region42: #{tpu_custom_call.1} parent=39 // pred_check_branch
          %420 = sbr.rel (%p418) target = $region44
        $region43: #{tpu_custom_call.1} parent=39 // pred_region
          %s421 = sand.u32 %s96, 1
          %s422 = scalar_lea.sflag [#allocation4], %s421
          %s423 = sand.u32 %s96, 1
          %s424 = smul.addr %s423, 128
          %s425 = scalar_lea.vmem [#allocation5], %s424
          %426 = dma.done %s422, 2048
        $region44: #{tpu_custom_call.1} parent=39 // pred_fallthru
          _
      $region40: #{tpu_custom_call.1} parent=5 // pred_fallthru
        _
    $region6: #{tpu_custom_call.1} parent=1 // loop_footer
      %s18 = sadd.s32 1, %s14
    $region7: #{tpu_custom_call.1} parent=1 // loop_footer_branch
      %13 = sbr.rel target = $region3
    $region8: #{tpu_custom_call.1} parent=1 // loop_exit
      _
    %427 = vsyncpa [#allocation3], 1
    %s428 = scalar_lea.sflag [#allocation3], 1
    %429 = vsyncpa %s428, 1
    %430 = vsyncpa [#allocation4], 1
    %s431 = scalar_lea.sflag [#allocation4], 1
    %432 = vsyncpa %s431, 1

</llo_original>
